<compile_context>
chip_gen: v7x
topology: tpu7x:2x2x1
jax: 0.10.0
libtpu: 0.0.40
codegen_flags: <defaults>
</compile_context>

<pallas_src>
import functools

import jax
import jax.numpy as jnp
from jax import lax
from jax.experimental import pallas as pl
from jax.experimental.pallas import tpu as pltpu

LAMBDA_1 = 0.5
LAMBDA_2 = 0.3


def _pmtem_partial_kernel(logits_ref, labels_ref, out_ref, *, n_rows):
    """Per row-tile: emit five partial sums packed into lane 0 of an (8,128) block."""
    i = pl.program_id(0)

    logits = logits_ref[...].astype(jnp.float32)
    labels = labels_ref[...].astype(jnp.float32)
    tn, c = logits.shape

    # Valid-row mask (the last tile may be partial; OOB rows hold undefined data).
    row_in_tile = lax.broadcasted_iota(jnp.int32, (tn, 1), 0)
    row_valid = (i * tn + row_in_tile) < n_rows            # [tn, 1] bool
    logits = jnp.where(row_valid, logits, 0.0)
    labels = jnp.where(row_valid, labels, 0.0)

    col = lax.broadcasted_iota(jnp.int32, (tn, c), 1)
    is_col0 = col == 0
    th_label = jnp.where(is_col0, 1.0, 0.0)                # one-hot on TH class
    labels = jnp.where(is_col0, 0.0, labels)               # labels[:, 0] = 0

    pos_w = labels                                          # branch-1 weights
    neg_w = 1.0 - (labels + th_label)                       # = 1 - p_mask (branch-2 weights)

    th = logits[:, 0:1]                                     # threshold logit [tn, 1]

    count1 = jnp.sum(labels, axis=1, keepdims=True)
    count1 = jnp.where(count1 == 0.0, 1.0, count1)
    count2 = jnp.sum(neg_w, axis=1, keepdims=True)
    count2 = jnp.where(count2 == 0.0, 1.0, count2)

    def two_way(logit_masked):
        # Stable 2-way softmax over {th, logit}: p_lg = sigmoid(d), p_th = 1 - p_lg.
        d = logit_masked - th
        z = jnp.exp(-jnp.abs(d))                 # 1 exp  (EUP)
        inv = pl.reciprocal(1.0 + z)             # 1 recip (EUP, exact)
        p_big = inv
        p_small = z * inv
        pos = d >= 0.0
        p_lg = jnp.where(pos, p_big, p_small)
        p_th = jnp.where(pos, p_small, p_big)
        # logs are shared between the loss term and the entropy term
        log_p_lg = jnp.log(p_lg + 1e-30)
        log_p_th = jnp.log(p_th + 1e-30)
        return p_th, p_lg, log_p_th, log_p_lg

    # ---- branch 1: positives (+TH) vs threshold ----
    logit1 = logits - neg_w * 1e30                          # (1 - p_mask) == neg_w
    p1_th, p1_lg, log_p1_th, log_p1_lg = two_way(logit1)
    loss1 = -jnp.sum(log_p1_lg * pos_w, axis=1, keepdims=True)        # [tn, 1]
    ent1 = p1_th * log_p1_th + p1_lg * log_p1_lg
    e3 = -jnp.sum(ent1 * pos_w, axis=1, keepdims=True)                # [tn, 1]

    # ---- branch 2: negatives (+TH) vs threshold ----
    logit2 = logits - labels * 1e30                         # (1 - n_mask) == labels
    p2_th, p2_lg, log_p2_th, log_p2_lg = two_way(logit2)
    loss2 = -jnp.sum(log_p2_th * neg_w, axis=1, keepdims=True)        # [tn, 1]
    ent2 = p2_th * log_p2_th + p2_lg * log_p2_lg
    e4 = -jnp.sum(ent2 * neg_w, axis=1, keepdims=True)                # [tn, 1]

    # ---- five scalar partial sums for this tile (padded rows contribute 0) ----
    s12 = jnp.sum(jnp.where(row_valid, loss1 + loss2, 0.0))
    s3 = jnp.sum(jnp.where(row_valid, e3, 0.0))
    s4 = jnp.sum(jnp.where(row_valid, e4, 0.0))
    sinv1 = jnp.sum(jnp.where(row_valid, 1.0 / count1, 0.0))
    sinv2 = jnp.sum(jnp.where(row_valid, 1.0 / count2, 0.0))

    # Pack the five scalars into lane 0 / rows 0..4 of a lane-dense (8,128) block.
    r8 = lax.broadcasted_iota(jnp.int32, (8, 128), 0)
    c128 = lax.broadcasted_iota(jnp.int32, (8, 128), 1)
    lane0 = c128 == 0
    packed = (jnp.where((r8 == 0) & lane0, s12, 0.0)
              + jnp.where((r8 == 1) & lane0, s3, 0.0)
              + jnp.where((r8 == 2) & lane0, sinv1, 0.0)
              + jnp.where((r8 == 3) & lane0, s4, 0.0)
              + jnp.where((r8 == 4) & lane0, sinv2, 0.0))
    out_ref[0] = packed


def pmtem_loss(logits, labels, lambda_1=LAMBDA_1, lambda_2=LAMBDA_2, tile_n=None):
    n, c = logits.shape
    assert labels.shape == (n, c)

    if tile_n is None:
        # Size the row tile so 2 inputs x 2 pipeline buffers stay well inside the
        # 32 MiB scoped-VMEM limit we request (safe headroom on v5e/v6e/v7x).
        budget = 20 * 1024 * 1024
        per_row = 2 * c * (logits.dtype.itemsize + labels.dtype.itemsize)
        tile_n = max(8, min(2048, budget // max(per_row, 1)))
    tile_n = int(tile_n)
    if tile_n >= n:
        tile_n = n                             # single full-extent block (always legal)
    else:
        tile_n = max(8, (tile_n // 8) * 8)     # sublane-aligned row tiles
    num_tiles = (n + tile_n - 1) // tile_n

    kernel = functools.partial(_pmtem_partial_kernel, n_rows=n)

    partials = pl.pallas_call(
        kernel,
        out_shape=jax.ShapeDtypeStruct((num_tiles, 8, 128), jnp.float32),
        grid=(num_tiles,),
        in_specs=[
            pl.BlockSpec((tile_n, c), lambda i: (i, 0)),
            pl.BlockSpec((tile_n, c), lambda i: (i, 0)),
        ],
        out_specs=pl.BlockSpec((1, 8, 128), lambda i: (i, 0, 0)),
        compiler_params=pltpu.CompilerParams(
            dimension_semantics=("parallel",),
            vmem_limit_bytes=32 * 1024 * 1024,
        ),
        cost_estimate=pl.CostEstimate(
            flops=int(40 * n * c),
            transcendentals=int(8 * n * c),
            bytes_accessed=int(n * c * (logits.dtype.itemsize + labels.dtype.itemsize)
                               + num_tiles * 8 * 128 * 4),
        ),
    )(logits, labels)

    # Tiny combine in the wrapper (num_tiles x 8 x 128 f32 -> scalar).
    sums = jnp.sum(partials, axis=(0, 2))                  # (8,), lanes >0 are zero
    s12, s3, sinv1, s4, sinv2 = sums[0], sums[1], sums[2], sums[3], sums[4]
    n_f = jnp.float32(n)
    loss = s12 / n_f + (lambda_1 * s3 * sinv1 + lambda_2 * s4 * sinv2) / (n_f * n_f)
    return loss


def pmtem_loss_ref(logits, labels, lambda_1=LAMBDA_1, lambda_2=LAMBDA_2):
    """Pure-JAX reference mirroring the PyTorch code (incl. its [N]/[N,1] broadcasting)."""
    logits = logits.astype(jnp.float32)
    labels = labels.astype(jnp.float32)
    th_label = jnp.zeros_like(labels).at[:, 0].set(1.0)
    labels = labels.at[:, 0].set(0.0)
    p_mask = labels + th_label
    n_mask = 1.0 - labels
    count = jnp.sum(labels, 1, keepdims=True)
    count = jnp.where(count == 0.0, 1.0, count)
    th = jnp.broadcast_to(logits[:, 0:1], logits.shape)
    logit1 = logits - (1.0 - p_mask) * 1e30
    probs1 = jax.nn.softmax(jnp.stack([th, logit1], axis=1), axis=1)
    loss1 = -jnp.sum(jnp.log(probs1[:, 1] + 1e-30) * labels, 1)
    loss3 = -jnp.sum(jnp.sum(probs1 * jnp.log(probs1 + 1e-30), 1) * labels, 1) / count
    count2 = jnp.sum(1.0 - p_mask, 1, keepdims=True)
    count2 = jnp.where(count2 == 0.0, 1.0, count2)
    logit2 = logits - (1.0 - n_mask) * 1e30
    probs2 = jax.nn.softmax(jnp.stack([th, logit2], axis=1), axis=1)
    loss2 = -jnp.sum(jnp.log(probs2[:, 0] + 1e-30) * (1.0 - p_mask), 1)
    loss4 = -jnp.sum(jnp.sum(probs2 * jnp.log(probs2 + 1e-30), 1) * (1.0 - p_mask), 1) / count2
    loss = loss1 + loss2 + lambda_1 * loss3 + lambda_2 * loss4
    return jnp.mean(loss)


if __name__ == "__main__":
    # Small shapes: 50 rows (not a tile multiple -> exercises row masking), 97 classes
    # (class 0 = threshold class, C not a lane multiple -> full-extent lane block).
    N, C = 50, 97
    key = jax.random.PRNGKey(0)
    k1, k2 = jax.random.split(key)

    logits = jax.random.normal(k1, (N, C), dtype=jnp.float32) * 2.0
    labels = (jax.random.uniform(k2, (N, C)) < 0.3).astype(jnp.float32)
    labels = labels.at[0, :].set(0.0)   # all-zero row -> exercises count==0 -> 1 path
    labels = labels.at[1, 0].set(1.0)   # TH-class label set -> gets zeroed in-kernel

    out_tiled = jax.block_until_ready(pmtem_loss(logits, labels, tile_n=16))  # grid of 4 tiles
    out_auto = jax.block_until_ready(pmtem_loss(logits, labels))              # auto tile (1 block)
    ref = pmtem_loss_ref(logits, labels)

    assert jnp.isfinite(out_tiled), "tiled kernel produced non-finite loss"
    assert jnp.isfinite(out_auto), "auto-tile kernel produced non-finite loss"
    assert jnp.allclose(out_tiled, ref, rtol=1e-4, atol=1e-4), (out_tiled, ref)
    assert jnp.allclose(out_auto, ref, rtol=1e-4, atol=1e-4), (out_auto, ref)

    print("KERNEL_OK")
</pallas_src>

<mosaic_0001>
module attributes {stable_mosaic.version = 11 : i64} {
  func.func @_pmtem_partial_kernel(%arg0: i32, %arg1: memref<16x97xf32, #tpu.memory_space<vmem>>, %arg2: memref<16x97xf32, #tpu.memory_space<vmem>>, %arg3: memref<1x8x128xf32, #tpu.memory_space<vmem>>) attributes {dimension_semantics = [#tpu.dimension_semantics<parallel>], iteration_bounds = array<i64: 4>, scalar_prefetch = 0 : i64, scratch_operands = 0 : i64, tpu.core_type = #tpu.core_type<tc>, window_params = [{transform_indices = @transform_0, window_bounds = array<i64: 16, 97>}, {transform_indices = @transform_1, window_bounds = array<i64: 16, 97>}, {transform_indices = @transform_2, window_bounds = array<i64: 1, 8, 128>}]} {
    %c0 = arith.constant 0 : index
    %c0_0 = arith.constant 0 : index
    %0 = vector.load %arg1[%c0, %c0_0] : memref<16x97xf32, #tpu.memory_space<vmem>>, vector<16x97xf32>
    %c0_1 = arith.constant 0 : index
    %c0_2 = arith.constant 0 : index
    %1 = vector.load %arg2[%c0_1, %c0_2] : memref<16x97xf32, #tpu.memory_space<vmem>>, vector<16x97xf32>
    %2 = tpu.iota {dimensions = array<i32: 0>} : vector<16x1xi32>
    %c16_i32 = arith.constant 16 : i32
    %3 = arith.muli %arg0, %c16_i32 : i32
    %4 = vector.broadcast %3 : i32 to vector<16x1xi32>
    %5 = arith.addi %4, %2 : vector<16x1xi32>
    %c50_i32 = arith.constant 50 : i32
    %6 = vector.broadcast %c50_i32 : i32 to vector<16x1xi32>
    %7 = arith.cmpi slt, %5, %6 : vector<16x1xi32>
    %cst = arith.constant 0.000000e+00 : f32
    %8 = vector.shape_cast %7 : vector<16x1xi1> to vector<16x1xi1>
    %9 = vector.broadcast %8 : vector<16x1xi1> to vector<16x97xi1>
    %10 = vector.broadcast %cst : f32 to vector<16x97xf32>
    %11 = arith.select %9, %0, %10 : vector<16x97xi1>, vector<16x97xf32>
    %cst_3 = arith.constant 0.000000e+00 : f32
    %12 = vector.shape_cast %7 : vector<16x1xi1> to vector<16x1xi1>
    %13 = vector.broadcast %12 : vector<16x1xi1> to vector<16x97xi1>
    %14 = vector.broadcast %cst_3 : f32 to vector<16x97xf32>
    %15 = arith.select %13, %1, %14 : vector<16x97xi1>, vector<16x97xf32>
    %16 = tpu.iota {dimensions = array<i32: 1>} : vector<16x97xi32>
    %c0_i32 = arith.constant 0 : i32
    %17 = vector.broadcast %c0_i32 : i32 to vector<16x97xi32>
    %18 = arith.cmpi eq, %16, %17 : vector<16x97xi32>
    %cst_4 = arith.constant 1.000000e+00 : f32
    %cst_5 = arith.constant 0.000000e+00 : f32
    %19 = vector.broadcast %cst_4 : f32 to vector<16x97xf32>
    %20 = vector.broadcast %cst_5 : f32 to vector<16x97xf32>
    %21 = arith.select %18, %19, %20 : vector<16x97xi1>, vector<16x97xf32>
    %cst_6 = arith.constant 0.000000e+00 : f32
    %22 = vector.broadcast %cst_6 : f32 to vector<16x97xf32>
    %23 = arith.select %18, %22, %15 : vector<16x97xi1>, vector<16x97xf32>
    %24 = arith.addf %23, %21 : vector<16x97xf32>
    %cst_7 = arith.constant 1.000000e+00 : f32
    %25 = vector.broadcast %cst_7 : f32 to vector<16x97xf32>
    %26 = arith.subf %25, %24 : vector<16x97xf32>
    %27 = vector.extract_strided_slice %11 {offsets = [0, 0], sizes = [16, 1], strides = [1, 1]} : vector<16x97xf32> to vector<16x1xf32>
    %cst_8 = arith.constant dense<0.000000e+00> : vector<16xf32>
    %28 = vector.multi_reduction <add>, %23, %cst_8 [1] : vector<16x97xf32> to vector<16xf32>
    %29 = vector.shape_cast %28 : vector<16xf32> to vector<16x1xf32>
    %cst_9 = arith.constant 0.000000e+00 : f32
    %30 = vector.broadcast %cst_9 : f32 to vector<16x1xf32>
    %31 = arith.cmpf oeq, %29, %30 : vector<16x1xf32>
    %cst_10 = arith.constant 1.000000e+00 : f32
    %32 = vector.broadcast %cst_10 : f32 to vector<16x1xf32>
    %33 = arith.select %31, %32, %29 : vector<16x1xi1>, vector<16x1xf32>
    %cst_11 = arith.constant dense<0.000000e+00> : vector<16xf32>
    %34 = vector.multi_reduction <add>, %26, %cst_11 [1] : vector<16x97xf32> to vector<16xf32>
    %35 = vector.shape_cast %34 : vector<16xf32> to vector<16x1xf32>
    %cst_12 = arith.constant 0.000000e+00 : f32
    %36 = vector.broadcast %cst_12 : f32 to vector<16x1xf32>
    %37 = arith.cmpf oeq, %35, %36 : vector<16x1xf32>
    %cst_13 = arith.constant 1.000000e+00 : f32
    %38 = vector.broadcast %cst_13 : f32 to vector<16x1xf32>
    %39 = arith.select %37, %38, %35 : vector<16x1xi1>, vector<16x1xf32>
    %cst_14 = arith.constant 1.000000e+30 : f32
    %40 = vector.broadcast %cst_14 : f32 to vector<16x97xf32>
    %41 = arith.mulf %26, %40 : vector<16x97xf32>
    %42 = arith.subf %11, %41 : vector<16x97xf32>
    %43 = vector.broadcast %27 : vector<16x1xf32> to vector<16x97xf32>
    %44 = arith.subf %42, %43 : vector<16x97xf32>
    %45 = math.absf %44 : vector<16x97xf32>
    %cst_15 = arith.constant 0.000000e+00 : f32
    %46 = vector.broadcast %cst_15 : f32 to vector<16x97xf32>
    %47 = arith.subf %46, %45 : vector<16x97xf32>
    %48 = math.exp %47 : vector<16x97xf32>
    %cst_16 = arith.constant 1.000000e+00 : f32
    %49 = vector.broadcast %cst_16 : f32 to vector<16x97xf32>
    %50 = arith.addf %49, %48 : vector<16x97xf32>
    %51 = tpu.reciprocal %50 : vector<16x97xf32> -> vector<16x97xf32>
    %52 = arith.mulf %48, %51 : vector<16x97xf32>
    %cst_17 = arith.constant 0.000000e+00 : f32
    %53 = vector.broadcast %cst_17 : f32 to vector<16x97xf32>
    %54 = arith.cmpf oge, %44, %53 : vector<16x97xf32>
    %55 = arith.select %54, %51, %52 : vector<16x97xi1>, vector<16x97xf32>
    %56 = arith.select %54, %52, %51 : vector<16x97xi1>, vector<16x97xf32>
    %cst_18 = arith.constant 1.000000e-30 : f32
    %57 = vector.broadcast %cst_18 : f32 to vector<16x97xf32>
    %58 = arith.addf %55, %57 : vector<16x97xf32>
    %59 = math.log %58 : vector<16x97xf32>
    %cst_19 = arith.constant 1.000000e-30 : f32
    %60 = vector.broadcast %cst_19 : f32 to vector<16x97xf32>
    %61 = arith.addf %56, %60 : vector<16x97xf32>
    %62 = math.log %61 : vector<16x97xf32>
    %63 = arith.mulf %59, %23 : vector<16x97xf32>
    %cst_20 = arith.constant dense<0.000000e+00> : vector<16xf32>
    %64 = vector.multi_reduction <add>, %63, %cst_20 [1] : vector<16x97xf32> to vector<16xf32>
    %65 = vector.shape_cast %64 : vector<16xf32> to vector<16x1xf32>
    %cst_21 = arith.constant 0.000000e+00 : f32
    %66 = vector.broadcast %cst_21 : f32 to vector<16x1xf32>
    %67 = arith.subf %66, %65 : vector<16x1xf32>
    %68 = arith.mulf %56, %62 : vector<16x97xf32>
    %69 = arith.mulf %55, %59 : vector<16x97xf32>
    %70 = arith.addf %68, %69 : vector<16x97xf32>
    %71 = arith.mulf %70, %23 : vector<16x97xf32>
    %cst_22 = arith.constant dense<0.000000e+00> : vector<16xf32>
    %72 = vector.multi_reduction <add>, %71, %cst_22 [1] : vector<16x97xf32> to vector<16xf32>
    %73 = vector.shape_cast %72 : vector<16xf32> to vector<16x1xf32>
    %cst_23 = arith.constant 0.000000e+00 : f32
    %74 = vector.broadcast %cst_23 : f32 to vector<16x1xf32>
    %75 = arith.subf %74, %73 : vector<16x1xf32>
    %cst_24 = arith.constant 1.000000e+30 : f32
    %76 = vector.broadcast %cst_24 : f32 to vector<16x97xf32>
    %77 = arith.mulf %23, %76 : vector<16x97xf32>
    %78 = arith.subf %11, %77 : vector<16x97xf32>
    %79 = vector.broadcast %27 : vector<16x1xf32> to vector<16x97xf32>
    %80 = arith.subf %78, %79 : vector<16x97xf32>
    %81 = math.absf %80 : vector<16x97xf32>
    %cst_25 = arith.constant 0.000000e+00 : f32
    %82 = vector.broadcast %cst_25 : f32 to vector<16x97xf32>
    %83 = arith.subf %82, %81 : vector<16x97xf32>
    %84 = math.exp %83 : vector<16x97xf32>
    %cst_26 = arith.constant 1.000000e+00 : f32
    %85 = vector.broadcast %cst_26 : f32 to vector<16x97xf32>
    %86 = arith.addf %85, %84 : vector<16x97xf32>
    %87 = tpu.reciprocal %86 : vector<16x97xf32> -> vector<16x97xf32>
    %88 = arith.mulf %84, %87 : vector<16x97xf32>
    %cst_27 = arith.constant 0.000000e+00 : f32
    %89 = vector.broadcast %cst_27 : f32 to vector<16x97xf32>
    %90 = arith.cmpf oge, %80, %89 : vector<16x97xf32>
    %91 = arith.select %90, %87, %88 : vector<16x97xi1>, vector<16x97xf32>
    %92 = arith.select %90, %88, %87 : vector<16x97xi1>, vector<16x97xf32>
    %cst_28 = arith.constant 1.000000e-30 : f32
    %93 = vector.broadcast %cst_28 : f32 to vector<16x97xf32>
    %94 = arith.addf %91, %93 : vector<16x97xf32>
    %95 = math.log %94 : vector<16x97xf32>
    %cst_29 = arith.constant 1.000000e-30 : f32
    %96 = vector.broadcast %cst_29 : f32 to vector<16x97xf32>
    %97 = arith.addf %92, %96 : vector<16x97xf32>
    %98 = math.log %97 : vector<16x97xf32>
    %99 = arith.mulf %98, %26 : vector<16x97xf32>
    %cst_30 = arith.constant dense<0.000000e+00> : vector<16xf32>
    %100 = vector.multi_reduction <add>, %99, %cst_30 [1] : vector<16x97xf32> to vector<16xf32>
    %101 = vector.shape_cast %100 : vector<16xf32> to vector<16x1xf32>
    %cst_31 = arith.constant 0.000000e+00 : f32
    %102 = vector.broadcast %cst_31 : f32 to vector<16x1xf32>
    %103 = arith.subf %102, %101 : vector<16x1xf32>
    %104 = arith.mulf %92, %98 : vector<16x97xf32>
    %105 = arith.mulf %91, %95 : vector<16x97xf32>
    %106 = arith.addf %104, %105 : vector<16x97xf32>
    %107 = arith.mulf %106, %26 : vector<16x97xf32>
    %cst_32 = arith.constant dense<0.000000e+00> : vector<16xf32>
    %108 = vector.multi_reduction <add>, %107, %cst_32 [1] : vector<16x97xf32> to vector<16xf32>
    %109 = vector.shape_cast %108 : vector<16xf32> to vector<16x1xf32>
    %cst_33 = arith.constant 0.000000e+00 : f32
    %110 = vector.broadcast %cst_33 : f32 to vector<16x1xf32>
    %111 = arith.subf %110, %109 : vector<16x1xf32>
    %112 = arith.addf %67, %103 : vector<16x1xf32>
    %cst_34 = arith.constant 0.000000e+00 : f32
    %113 = vector.broadcast %cst_34 : f32 to vector<16x1xf32>
    %114 = arith.select %7, %112, %113 : vector<16x1xi1>, vector<16x1xf32>
    %115 = vector.shape_cast %114 : vector<16x1xf32> to vector<1x16x1xf32>
    %cst_35 = arith.constant dense<0.000000e+00> : vector<1xf32>
    %116 = vector.multi_reduction <add>, %115, %cst_35 [1, 2] : vector<1x16x1xf32> to vector<1xf32>
    %117 = vector.shape_cast %116 : vector<1xf32> to vector<1x1x1xf32>
    %118 = vector.extract %117[0, 0, 0] : f32 from vector<1x1x1xf32>
    %cst_36 = arith.constant 0.000000e+00 : f32
    %119 = vector.broadcast %cst_36 : f32 to vector<16x1xf32>
    %120 = arith.select %7, %75, %119 : vector<16x1xi1>, vector<16x1xf32>
    %121 = vector.shape_cast %120 : vector<16x1xf32> to vector<1x16x1xf32>
    %cst_37 = arith.constant dense<0.000000e+00> : vector<1xf32>
    %122 = vector.multi_reduction <add>, %121, %cst_37 [1, 2] : vector<1x16x1xf32> to vector<1xf32>
    %123 = vector.shape_cast %122 : vector<1xf32> to vector<1x1x1xf32>
    %124 = vector.extract %123[0, 0, 0] : f32 from vector<1x1x1xf32>
    %cst_38 = arith.constant 0.000000e+00 : f32
    %125 = vector.broadcast %cst_38 : f32 to vector<16x1xf32>
    %126 = arith.select %7, %111, %125 : vector<16x1xi1>, vector<16x1xf32>
    %127 = vector.shape_cast %126 : vector<16x1xf32> to vector<1x16x1xf32>
    %cst_39 = arith.constant dense<0.000000e+00> : vector<1xf32>
    %128 = vector.multi_reduction <add>, %127, %cst_39 [1, 2] : vector<1x16x1xf32> to vector<1xf32>
    %129 = vector.shape_cast %128 : vector<1xf32> to vector<1x1x1xf32>
    %130 = vector.extract %129[0, 0, 0] : f32 from vector<1x1x1xf32>
    %cst_40 = arith.constant 1.000000e+00 : f32
    %131 = vector.broadcast %cst_40 : f32 to vector<16x1xf32>
    %132 = arith.divf %131, %33 : vector<16x1xf32>
    %cst_41 = arith.constant 0.000000e+00 : f32
    %133 = vector.broadcast %cst_41 : f32 to vector<16x1xf32>
    %134 = arith.select %7, %132, %133 : vector<16x1xi1>, vector<16x1xf32>
    %135 = vector.shape_cast %134 : vector<16x1xf32> to vector<1x16x1xf32>
    %cst_42 = arith.constant dense<0.000000e+00> : vector<1xf32>
    %136 = vector.multi_reduction <add>, %135, %cst_42 [1, 2] : vector<1x16x1xf32> to vector<1xf32>
    %137 = vector.shape_cast %136 : vector<1xf32> to vector<1x1x1xf32>
    %138 = vector.extract %137[0, 0, 0] : f32 from vector<1x1x1xf32>
    %cst_43 = arith.constant 1.000000e+00 : f32
    %139 = vector.broadcast %cst_43 : f32 to vector<16x1xf32>
    %140 = arith.divf %139, %39 : vector<16x1xf32>
    %cst_44 = arith.constant 0.000000e+00 : f32
    %141 = vector.broadcast %cst_44 : f32 to vector<16x1xf32>
    %142 = arith.select %7, %140, %141 : vector<16x1xi1>, vector<16x1xf32>
    %143 = vector.shape_cast %142 : vector<16x1xf32> to vector<1x16x1xf32>
    %cst_45 = arith.constant dense<0.000000e+00> : vector<1xf32>
    %144 = vector.multi_reduction <add>, %143, %cst_45 [1, 2] : vector<1x16x1xf32> to vector<1xf32>
    %145 = vector.shape_cast %144 : vector<1xf32> to vector<1x1x1xf32>
    %146 = vector.extract %145[0, 0, 0] : f32 from vector<1x1x1xf32>
    %147 = tpu.iota {dimensions = array<i32: 0>} : vector<8x128xi32>
    %148 = tpu.iota {dimensions = array<i32: 1>} : vector<8x128xi32>
    %c0_i32_46 = arith.constant 0 : i32
    %149 = vector.broadcast %c0_i32_46 : i32 to vector<8x128xi32>
    %150 = arith.cmpi eq, %148, %149 : vector<8x128xi32>
    %c0_i32_47 = arith.constant 0 : i32
    %151 = vector.broadcast %c0_i32_47 : i32 to vector<8x128xi32>
    %152 = arith.cmpi eq, %147, %151 : vector<8x128xi32>
    %153 = arith.andi %152, %150 : vector<8x128xi1>
    %cst_48 = arith.constant 0.000000e+00 : f32
    %154 = vector.broadcast %118 : f32 to vector<8x128xf32>
    %155 = vector.broadcast %cst_48 : f32 to vector<8x128xf32>
    %156 = arith.select %153, %154, %155 : vector<8x128xi1>, vector<8x128xf32>
    %c1_i32 = arith.constant 1 : i32
    %157 = vector.broadcast %c1_i32 : i32 to vector<8x128xi32>
    %158 = arith.cmpi eq, %147, %157 : vector<8x128xi32>
    %159 = arith.andi %158, %150 : vector<8x128xi1>
    %cst_49 = arith.constant 0.000000e+00 : f32
    %160 = vector.broadcast %124 : f32 to vector<8x128xf32>
    %161 = vector.broadcast %cst_49 : f32 to vector<8x128xf32>
    %162 = arith.select %159, %160, %161 : vector<8x128xi1>, vector<8x128xf32>
    %163 = arith.addf %156, %162 : vector<8x128xf32>
    %c2_i32 = arith.constant 2 : i32
    %164 = vector.broadcast %c2_i32 : i32 to vector<8x128xi32>
    %165 = arith.cmpi eq, %147, %164 : vector<8x128xi32>
    %166 = arith.andi %165, %150 : vector<8x128xi1>
    %cst_50 = arith.constant 0.000000e+00 : f32
    %167 = vector.broadcast %138 : f32 to vector<8x128xf32>
    %168 = vector.broadcast %cst_50 : f32 to vector<8x128xf32>
    %169 = arith.select %166, %167, %168 : vector<8x128xi1>, vector<8x128xf32>
    %170 = arith.addf %163, %169 : vector<8x128xf32>
    %c3_i32 = arith.constant 3 : i32
    %171 = vector.broadcast %c3_i32 : i32 to vector<8x128xi32>
    %172 = arith.cmpi eq, %147, %171 : vector<8x128xi32>
    %173 = arith.andi %172, %150 : vector<8x128xi1>
    %cst_51 = arith.constant 0.000000e+00 : f32
    %174 = vector.broadcast %130 : f32 to vector<8x128xf32>
    %175 = vector.broadcast %cst_51 : f32 to vector<8x128xf32>
    %176 = arith.select %173, %174, %175 : vector<8x128xi1>, vector<8x128xf32>
    %177 = arith.addf %170, %176 : vector<8x128xf32>
    %c4_i32 = arith.constant 4 : i32
    %178 = vector.broadcast %c4_i32 : i32 to vector<8x128xi32>
    %179 = arith.cmpi eq, %147, %178 : vector<8x128xi32>
    %180 = arith.andi %179, %150 : vector<8x128xi1>
    %cst_52 = arith.constant 0.000000e+00 : f32
    %181 = vector.broadcast %146 : f32 to vector<8x128xf32>
    %182 = vector.broadcast %cst_52 : f32 to vector<8x128xf32>
    %183 = arith.select %180, %181, %182 : vector<8x128xi1>, vector<8x128xf32>
    %184 = arith.addf %177, %183 : vector<8x128xf32>
    %c0_53 = arith.constant 0 : index
    %c0_54 = arith.constant 0 : index
    %c0_55 = arith.constant 0 : index
    %185 = vector.load %arg3[%c0_53, %c0_54, %c0_55] : memref<1x8x128xf32, #tpu.memory_space<vmem>>, vector<1x8x128xf32>
    %186 = vector.shape_cast %185 : vector<1x8x128xf32> to vector<8x128xf32>
    %187 = vector.shape_cast %184 : vector<8x128xf32> to vector<1x8x128xf32>
    tpu.vector_store %arg3[%c0_53, %c0_54, %c0_55], %187 {strides = array<i32>} : memref<1x8x128xf32, #tpu.memory_space<vmem>>, vector<1x8x128xf32>,
    return
  }
  func.func @transform_0(%arg0: i32) -> (i32, i32) {
    %c0_i32 = arith.constant 0 : i32
    %c0_i32_0 = arith.constant 0 : i32
    return %arg0, %c0_i32 : i32, i32
  }
  func.func @transform_1(%arg0: i32) -> (i32, i32) {
    %c0_i32 = arith.constant 0 : i32
    %c0_i32_0 = arith.constant 0 : i32
    return %arg0, %c0_i32 : i32, i32
  }
  func.func @transform_2(%arg0: i32) -> (i32, i32, i32) {
    %c0_i32 = arith.constant 0 : i32
    %c0_i32_0 = arith.constant 0 : i32
    %c0_i32_1 = arith.constant 0 : i32
    return %arg0, %c0_i32, %c0_i32_0 : i32, i32, i32
  }
}

</mosaic_0001>

<llo_original>
// kernel: tpu_custom_call.1
$region0: #{tpu_custom_call.1}
  #allocation0 [shape = 'u32[]', space=smem, size = 0x4, offset = 0x4, fixed_abs, tag = 'smem constant byte address 0x4 - core index']
  #allocation1 [shape = 'u32[144,128]{1,0:T(1,128)}', space=vmem, size = 0x12000, scoped, tag = 'internal scratch']
  %s0 = inlined_call_operand.hbm [shape: f32[50,97], index: 0, kind: input, shape index: {}]
  %s1 = inlined_call_operand.hbm [shape: f32[50,97], index: 1, kind: input, shape index: {}]
  %s2 = inlined_call_operand.hbm [shape: f32[4,8,128], index: 2, kind: output, shape index: {}]
  %s3 = sld [smem:[#allocation0]]
  $region49: #{tpu_custom_call.1} parent=0
    _
  %s5 = ssub.s32 1, %s3
  %s6 = scalar_select 0, %s5, %s3
  $region1: #{tpu_custom_call.1} parent=0
    #allocation2 [shape = 'u8[16384]{0}', space=vmem, size = 0x4000, scoped, tag = 'input window, operand 0']
    #allocation3 [shape = 's32[2]{0}', space=sflag, size = 0x8, scoped, tag = 'scoped memory for tpu_custom_call.1']
    #allocation4 [shape = 's32[2]{0}', space=sflag, size = 0x8, scoped, tag = 'scoped memory for tpu_custom_call.1']
    #allocation5 [shape = 'u8[16384]{0}', space=vmem, size = 0x4000, scoped, tag = 'input window, operand 1']
    #allocation6 [shape = 's32[2]{0}', space=sflag, size = 0x8, scoped, tag = 'scoped memory for tpu_custom_call.1']
    #allocation7 [shape = 'u8[8192]{0}', space=vmem, size = 0x2000, scoped, tag = 'output window, operand 0']
    %7 = vsyncpa [#allocation3], 0
    %s8 = scalar_lea.sflag [#allocation3], 1
    %9 = vsyncpa %s8, 0
    %10 = vsyncpa [#allocation6], 0
    %s11 = scalar_lea.sflag [#allocation6], 1
    %12 = vsyncpa %s11, 0
    %13 = vsyncpa [#allocation4], 0
    %s14 = scalar_lea.sflag [#allocation4], 1
    %15 = vsyncpa %s14, 0
    loop: start=0, step=1, limit=6
    $region2: #{tpu_custom_call.1} parent=1 // loop_pre_header
      _
    $region3: #{tpu_custom_call.1} parent=1 // loop_header
      %s17 = sphi 0, %s21
      %p18 = scmp.ge.s32.totalorder %s17, 6
      %s27 = sphi 0, %s29
      %s30 = sphi 0, %s27
      %s31 = sphi 0, %s30
      %s47 = sphi 0, %s31
      %s53 = sphi 0, %s55
      %s56 = sphi 0, %s53
      %s57 = sphi 0, %s56
      %s73 = sphi 0, %s57
      %s79 = sphi 0, %s81
      %s82 = sphi 0, %s79
      %s83 = sphi 0, %s82
      %s99 = sphi 0, %s83
    $region4: #{tpu_custom_call.1} parent=1 // loop_header_branch
      %20 = sbr.rel (%p18) target = $region8
    $region5: #{tpu_custom_call.1} parent=1 // loop_body
      %s22 = ssub.s32 %s17, 1
      %s23 = ssub.s32 %s17, 2
      %s24 = sadd.s32 %s17, 1
      %s25 = ssub.s32 %s17, %s24
      %p26 = scmp.eq.s32.totalorder %s25, 0
      %s28 = sadd.s32 %s27, 1
      %s29 = scalar_select %p26, %s27, %s28
      %p32 = pneg %p26
      %p33 = scmp.eq.s32.totalorder %s17, 3
      %p34 = por %p32, %p33
      %p35 = scmp.ne.s32.totalorder %s27, %s30
      %p36 = scmp.eq.s32.totalorder %s17, 0
      %p37 = por %p35, %p36
      %p38 = scmp.ne.s32.totalorder %s27, %s30
      %p39 = scmp.eq.s32.totalorder %s22, 3
      %p40 = por %p38, %p39
      %p41 = scmp.ne.s32.totalorder %s30, %s31
      %p42 = scmp.eq.s32.totalorder %s22, 0
      %p43 = por %p41, %p42
      %p44 = scmp.ne.s32.totalorder %s30, %s31
      %p45 = scmp.eq.s32.totalorder %s23, 3
      %p46 = por %p44, %p45
      %p48 = scmp.ne.s32.totalorder %s31, %s47
      %p49 = scmp.eq.s32.totalorder %s23, 0
      %p50 = por %p48, %p49
      %s51 = ssub.s32 %s17, %s24
      %p52 = scmp.eq.s32.totalorder %s51, 0
      %s54 = sadd.s32 %s53, 1
      %s55 = scalar_select %p52, %s53, %s54
      %p58 = pneg %p52
      %p59 = scmp.eq.s32.totalorder %s17, 3
      %p60 = por %p58, %p59
      %p61 = scmp.ne.s32.totalorder %s53, %s56
      %p62 = scmp.eq.s32.totalorder %s17, 0
      %p63 = por %p61, %p62
      %p64 = scmp.ne.s32.totalorder %s53, %s56
      %p65 = scmp.eq.s32.totalorder %s22, 3
      %p66 = por %p64, %p65
      %p67 = scmp.ne.s32.totalorder %s56, %s57
      %p68 = scmp.eq.s32.totalorder %s22, 0
      %p69 = por %p67, %p68
      %p70 = scmp.ne.s32.totalorder %s56, %s57
      %p71 = scmp.eq.s32.totalorder %s23, 3
      %p72 = por %p70, %p71
      %p74 = scmp.ne.s32.totalorder %s57, %s73
      %p75 = scmp.eq.s32.totalorder %s23, 0
      %p76 = por %p74, %p75
      %s77 = ssub.s32 %s17, %s24
      %p78 = scmp.eq.s32.totalorder %s77, 0
      %s80 = sadd.s32 %s79, 1
      %s81 = scalar_select %p78, %s79, %s80
      %p84 = pneg %p78
      %p85 = scmp.eq.s32.totalorder %s17, 3
      %p86 = por %p84, %p85
      %p87 = scmp.ne.s32.totalorder %s79, %s82
      %p88 = scmp.eq.s32.totalorder %s17, 0
      %p89 = por %p87, %p88
      %p90 = scmp.ne.s32.totalorder %s79, %s82
      %p91 = scmp.eq.s32.totalorder %s22, 3
      %p92 = por %p90, %p91
      %p93 = scmp.ne.s32.totalorder %s82, %s83
      %p94 = scmp.eq.s32.totalorder %s22, 0
      %p95 = por %p93, %p94
      %p96 = scmp.ne.s32.totalorder %s82, %s83
      %p97 = scmp.eq.s32.totalorder %s23, 3
      %p98 = por %p96, %p97
      %p100 = scmp.ne.s32.totalorder %s83, %s99
      %p101 = scmp.eq.s32.totalorder %s23, 0
      %p102 = por %p100, %p101
      %p103 = scmp.le.s32.totalorder 1, %s17
      %p104 = scmp.lt.s32.totalorder %s17, 5
      %p105 = pnand %p103, %p104
      %p106 = pneg %p105
      // Predicated region
      $region9: #{tpu_custom_call.1} parent=5 // pred_check
        _
      $region10: #{tpu_custom_call.1} parent=5 // pred_check_branch
        %108 = sbr.rel (%p105) target = $region12
      $region11: #{tpu_custom_call.1} parent=5 // pred_region
        %s109 = ssub.s32 %s17, 1
      $region12: #{tpu_custom_call.1} parent=5 // pred_fallthru
        _
      %p110 = scmp.lt.s32.totalorder %s17, 4
      // Predicated region
      $region13: #{tpu_custom_call.1} parent=5 // pred_check
        %p111 = pneg %p110
      $region14: #{tpu_custom_call.1} parent=5 // pred_check_branch
        %113 = sbr.rel (%p111) target = $region16
      $region15: #{tpu_custom_call.1} parent=5 // pred_region
        // Predicated region
        $region17: #{tpu_custom_call.1} parent=15 // pred_check
          %p114 = pneg %p37
        $region18: #{tpu_custom_call.1} parent=15 // pred_check_branch
          %116 = sbr.rel (%p114) target = $region20
        $region19: #{tpu_custom_call.1} parent=15 // pred_region
          %s117 = sand.u32 %s27, 1
          %s118 = scalar_lea.sflag [#allocation3], %s117
          %s119 = sand.u32 %s27, 1
          %s120 = smul.addr %s119, 16
          %s121 = scalar_lea.vmem [#allocation2], %s120
          %s122 = smul.u32 2, %s17
          %s123 = ssub.s32 7, %s122
          %p124 = scmp.lt.s32.totalorder %s123, 2
          %s125 = scalar_select %p124, %s123, 2
          %s126 = smul.u32 128, %s125
          %s128 = ssub.s32 256, %s126
          %129 = vsyncadd %s118, %s128
          %p130 = scmp.ne.s32.totalorder 0, %s126
          %s131 = smul.addr %s122, 128
          %s132 = scalar_lea.hbm %s0, %s131
          %s133 = smul.u32 8, %s125
          %s134 = sshll.u32 %s121, 4
          %s135 = int_to_ptr.vmem [resolvable:$true] %s134
          %s136 = sshll.u32 %s133, 4
          %140 = dma.hbm_to_vmem [thread:$0]  (%p130), %s132, %s136, %s135, %s118, 128, 128, 8
        $region20: #{tpu_custom_call.1} parent=15 // pred_fallthru
          _
        // Predicated region
        $region21: #{tpu_custom_call.1} parent=15 // pred_check
          %p141 = pneg %p63
        $region22: #{tpu_custom_call.1} parent=15 // pred_check_branch
          %143 = sbr.rel (%p141) target = $region24
        $region23: #{tpu_custom_call.1} parent=15 // pred_region
          %s144 = sand.u32 %s53, 1
          %s145 = scalar_lea.sflag [#allocation6], %s144
          %s146 = sand.u32 %s53, 1
          %s147 = smul.addr %s146, 16
          %s148 = scalar_lea.vmem [#allocation5], %s147
          %s149 = smul.u32 2, %s17
          %s150 = ssub.s32 7, %s149
          %p151 = scmp.lt.s32.totalorder %s150, 2
          %s152 = scalar_select %p151, %s150, 2
          %s153 = smul.u32 128, %s152
          %s155 = ssub.s32 256, %s153
          %156 = vsyncadd %s145, %s155
          %p157 = scmp.ne.s32.totalorder 0, %s153
          %s158 = smul.addr %s149, 128
          %s159 = scalar_lea.hbm %s1, %s158
          %s160 = smul.u32 8, %s152
          %s161 = sshll.u32 %s148, 4
          %s162 = int_to_ptr.vmem [resolvable:$true] %s161
          %s163 = sshll.u32 %s160, 4
          %167 = dma.hbm_to_vmem [thread:$0]  (%p157), %s159, %s163, %s162, %s145, 128, 128, 8
        $region24: #{tpu_custom_call.1} parent=15 // pred_fallthru
          _
      $region16: #{tpu_custom_call.1} parent=5 // pred_fallthru
        _
      %p168 = scmp.le.s32.totalorder 1, %s17
      %p169 = scmp.lt.s32.totalorder %s17, 5
      %p170 = pnand %p168, %p169
      %p171 = pneg %p170
      // Predicated region
      $region25: #{tpu_custom_call.1} parent=5 // pred_check
        _
      $region26: #{tpu_custom_call.1} parent=5 // pred_check_branch
        %173 = sbr.rel (%p170) target = $region28
      $region27: #{tpu_custom_call.1} parent=5 // pred_region
        %s174 = ssub.s32 %s17, 1
        %s175 = sand.u32 %s30, 1
        %s176 = scalar_lea.sflag [#allocation3], %s175
        %s177 = sand.u32 %s30, 1
        %s178 = smul.addr %s177, 16
        %s179 = scalar_lea.vmem [#allocation2], %s178
        // Predicated region
        $region29: #{tpu_custom_call.1} parent=27 // pred_check
          %p180 = pneg %p43
        $region30: #{tpu_custom_call.1} parent=27 // pred_check_branch
          %182 = sbr.rel (%p180) target = $region32
        $region31: #{tpu_custom_call.1} parent=27 // pred_region
          %183 = dma.done %s176, 256
        $region32: #{tpu_custom_call.1} parent=27 // pred_fallthru
          _
        %s184 = sand.u32 %s56, 1
        %s185 = scalar_lea.sflag [#allocation6], %s184
        %s186 = sand.u32 %s56, 1
        %s187 = smul.addr %s186, 16
        %s188 = scalar_lea.vmem [#allocation5], %s187
        // Predicated region
        $region33: #{tpu_custom_call.1} parent=27 // pred_check
          %p189 = pneg %p69
        $region34: #{tpu_custom_call.1} parent=27 // pred_check_branch
          %191 = sbr.rel (%p189) target = $region36
        $region35: #{tpu_custom_call.1} parent=27 // pred_region
          %192 = dma.done %s185, 256
        $region36: #{tpu_custom_call.1} parent=27 // pred_fallthru
          _
        %s193 = sand.u32 %s30, 1
        %s194 = scalar_lea.sflag [#allocation3], %s193
        %s195 = sand.u32 %s30, 1
        %s196 = smul.addr %s195, 16
        %s197 = scalar_lea.vmem [#allocation2], %s196
        %p198 = pneg %p43
        %p199 = pneg %p40
        %s200 = sand.u32 %s56, 1
        %s201 = scalar_lea.sflag [#allocation6], %s200
        %s202 = sand.u32 %s56, 1
        %s203 = smul.addr %s202, 16
        %s204 = scalar_lea.vmem [#allocation5], %s203
        %p205 = pneg %p69
        %p206 = pneg %p66
        %p207 = pneg %p95
        %p208 = pneg %p92
        %s209 = sand.u32 %s82, 1
        %s210 = scalar_lea.sflag [#allocation4], %s209
        %s211 = sand.u32 %s82, 1
        %s212 = smul.addr %s211, 8
        %s213 = scalar_lea.vmem [#allocation7], %s212
        %s214 = smul.u32 2, %s22
        %s215 = ssub.s32 7, %s214
        %p216 = scmp.lt.s32.totalorder %s215, 2
        %s217 = scalar_select %p216, %s215, 2
        %s218 = smul.u32 128, %s217
        %s219 = smul.u32 2, %s22
        %s220 = ssub.s32 7, %s219
        %p221 = scmp.lt.s32.totalorder %s220, 2
        %s222 = scalar_select %p221, %s220, 2
        %s223 = smul.u32 128, %s222
        %v224 = vld [vmem:[%s179] sm:$0xff]
        %v225 = vld [vmem:[%s179 + $0x8] sm:$0xff]
        %v226 = vld [vmem:[%s188] sm:$0xff]
        %v227 = vld [vmem:[%s188 + $0x8] sm:$0xff]
        %v228 = vlaneseq
        %v229 = vshrl.u32 %v228, 7
        %v230 = vadd.s32 %v229, 8
        %s231 = smul.u32 %s22, 16
        %v232 = vstv %s231
        %v233 = vadd.s32 %v232, %v229
        %v234 = vadd.s32 %v232, %v230
        %vm235 = vcmp.lt.s32.totalorder %v233, 50
        %vm236 = vcmp.lt.s32.totalorder %v234, 50
        %v237 = vsel %vm235, 1, 0
        %v238 = vsel %vm236, 1, 0
        %vm239 = vcmp.eq.s32.totalorder %v237, 1
        %vm240 = vcmp.eq.s32.totalorder %v238, 1
        %v241 = vsel %vm239, %v224, 0.0
        %v242 = vsel %vm240, %v225, 0.0
        %v243 = vsel %vm239, %v226, 0.0
        %v244 = vsel %vm240, %v227, 0.0
        %v245 = vlaneseq
        %v246 = vand.u32 %v245, 127
        %vm247 = vcmp.eq.s32.totalorder %v246, 0
        %v248 = vsel %vm247, 1.0, 0.0
        %v249 = vsel %vm247, 0.0, %v243
        %v250 = vsel %vm247, 0.0, %v244
        %v251 = vadd.f32 %v249, %v248
        %v252 = vadd.f32 %v250, %v248
        %v253 = vsub.f32 1.0, %v251
        %v254 = vsub.f32 1.0, %v252
        %vm255 = vcmask 793600
        %v256 = vsel %vm255, %v249, 0.0
        %257 = vadd.xlane.f32.xlu0 %v256
        %v258 = vpop.xlane.xlu0 %257
        %v259 = vsel %vm255, %v250, 0.0
        %260 = vadd.xlane.f32.xlu0 %v259
        %v261 = vpop.xlane.xlu0 %260
        %vm262 = vcmp.eq.f32.partialorder %v258, 0.0
        %vm263 = vcmp.eq.f32.partialorder %v261, 0.0
        %v264 = vsel %vm262, 1.0, %v258
        %v265 = vsel %vm263, 1.0, %v261
        %v266 = vsel %vm255, %v253, 0.0
        %267 = vadd.xlane.f32.xlu0 %v266
        %v268 = vpop.xlane.xlu0 %267
        %v269 = vsel %vm255, %v254, 0.0
        %270 = vadd.xlane.f32.xlu0 %v269
        %v271 = vpop.xlane.xlu0 %270
        %vm272 = vcmp.eq.f32.partialorder %v268, 0.0
        %vm273 = vcmp.eq.f32.partialorder %v271, 0.0
        %v274 = vsel %vm272, 1.0, %v268
        %v275 = vsel %vm273, 1.0, %v271
        %v276 = vmul.f32 %v253, 1e+30
        %v277 = vmul.f32 %v254, 1e+30
        %v278 = vsub.f32 %v241, %v276
        %v279 = vsub.f32 %v242, %v277
        %281 = vset.pattern.permute.xlu0 0
        %282 = vperm.xlu0 %281, %v241
        %v283 = vpop.permute.xlu0 %282
        %286 = vset.pattern.permute.xlu0 0
        %287 = vperm.xlu0 %286, %v242
        %v288 = vpop.permute.xlu0 %287
        %v290 = vsub.f32 %v278, %v283
        %v291 = vsub.f32 %v279, %v288
        %v292 = vand.u32 2147483647, %v290
        %v293 = vand.u32 2147483647, %v291
        %v294 = vsub.f32 0.0, %v292
        %v295 = vsub.f32 0.0, %v293
        %v296 = vmul.f32 %v294, 1.442695
        %v297 = vpow.pop %v296
        %v298 = vmul.f32 %v295, 1.442695
        %v299 = vpow.pop %v298
        %v300 = vadd.f32 %v297, 1.0
        %v301 = vadd.f32 %v299, 1.0
        %v302 = vrcp.pop %v300
        %v303 = vrcp.pop %v301
        %v304 = vmul.f32 %v297, %v302
        %v305 = vmul.f32 %v299, %v303
        %vm306 = vcmp.ge.f32.partialorder %v290, 0.0
        %vm307 = vcmp.ge.f32.partialorder %v291, 0.0
        %v308 = vsel %vm306, %v302, %v304
        %v309 = vsel %vm307, %v303, %v305
        %v310 = vsel %vm306, %v304, %v302
        %v311 = vsel %vm307, %v305, %v303
        %v312 = vadd.f32 %v308, 1e-30
        %v313 = vadd.f32 %v309, 1e-30
        %v314 = vlog2.pop %v312
        %v315 = vmul.f32 %v314, 0.6931472
        %v316 = vlog2.pop %v313
        %v317 = vmul.f32 %v316, 0.6931472
        %v318 = vadd.f32 %v310, 1e-30
        %v319 = vadd.f32 %v311, 1e-30
        %v320 = vlog2.pop %v318
        %v321 = vmul.f32 %v320, 0.6931472
        %v322 = vlog2.pop %v319
        %v323 = vmul.f32 %v322, 0.6931472
        %v324 = vmul.f32 %v315, %v249
        %v325 = vmul.f32 %v317, %v250
        %v326 = vsel %vm255, %v324, 0.0
        %327 = vadd.xlane.f32.xlu0 %v326
        %v328 = vpop.xlane.xlu0 %327
        %v329 = vsel %vm255, %v325, 0.0
        %330 = vadd.xlane.f32.xlu0 %v329
        %v331 = vpop.xlane.xlu0 %330
        %v332 = vsub.f32 0.0, %v328
        %v333 = vsub.f32 0.0, %v331
        %v334 = vmul.f32 %v310, %v321
        %v335 = vmul.f32 %v311, %v323
        %v336 = vmul.f32 %v308, %v315
        %v337 = vmul.f32 %v309, %v317
        %v338 = vadd.f32 %v334, %v336
        %v339 = vadd.f32 %v335, %v337
        %v340 = vmul.f32 %v338, %v249
        %v341 = vmul.f32 %v339, %v250
        %v342 = vsel %vm255, %v340, 0.0
        %343 = vadd.xlane.f32.xlu0 %v342
        %v344 = vpop.xlane.xlu0 %343
        %v345 = vsel %vm255, %v341, 0.0
        %346 = vadd.xlane.f32.xlu0 %v345
        %v347 = vpop.xlane.xlu0 %346
        %v348 = vsub.f32 0.0, %v344
        %v349 = vsub.f32 0.0, %v347
        %v350 = vmul.f32 %v249, 1e+30
        %v351 = vmul.f32 %v250, 1e+30
        %v352 = vsub.f32 %v241, %v350
        %v353 = vsub.f32 %v242, %v351
        %v354 = vsub.f32 %v352, %v283
        %v355 = vsub.f32 %v353, %v288
        %v356 = vand.u32 2147483647, %v354
        %v357 = vand.u32 2147483647, %v355
        %v358 = vsub.f32 0.0, %v356
        %v359 = vsub.f32 0.0, %v357
        %v360 = vmul.f32 %v358, 1.442695
        %v361 = vpow.pop %v360
        %v362 = vmul.f32 %v359, 1.442695
        %v363 = vpow.pop %v362
        %v364 = vadd.f32 %v361, 1.0
        %v365 = vadd.f32 %v363, 1.0
        %v366 = vrcp.pop %v364
        %v367 = vrcp.pop %v365
        %v368 = vmul.f32 %v361, %v366
        %v369 = vmul.f32 %v363, %v367
        %vm370 = vcmp.ge.f32.partialorder %v354, 0.0
        %vm371 = vcmp.ge.f32.partialorder %v355, 0.0
        %v372 = vsel %vm370, %v366, %v368
        %v373 = vsel %vm371, %v367, %v369
        %v374 = vsel %vm370, %v368, %v366
        %v375 = vsel %vm371, %v369, %v367
        %v376 = vadd.f32 %v372, 1e-30
        %v377 = vadd.f32 %v373, 1e-30
        %v378 = vlog2.pop %v376
        %v379 = vmul.f32 %v378, 0.6931472
        %v380 = vlog2.pop %v377
        %v381 = vmul.f32 %v380, 0.6931472
        %v382 = vadd.f32 %v374, 1e-30
        %v383 = vadd.f32 %v375, 1e-30
        %v384 = vlog2.pop %v382
        %v385 = vmul.f32 %v384, 0.6931472
        %v386 = vlog2.pop %v383
        %v387 = vmul.f32 %v386, 0.6931472
        %v388 = vmul.f32 %v385, %v253
        %v389 = vmul.f32 %v387, %v254
        %v390 = vsel %vm255, %v388, 0.0
        %391 = vadd.xlane.f32.xlu0 %v390
        %v392 = vpop.xlane.xlu0 %391
        %v393 = vsel %vm255, %v389, 0.0
        %394 = vadd.xlane.f32.xlu0 %v393
        %v395 = vpop.xlane.xlu0 %394
        %v396 = vsub.f32 0.0, %v392
        %v397 = vsub.f32 0.0, %v395
        %v398 = vmul.f32 %v374, %v385
        %v399 = vmul.f32 %v375, %v387
        %v400 = vmul.f32 %v372, %v379
        %v401 = vmul.f32 %v373, %v381
        %v402 = vadd.f32 %v398, %v400
        %v403 = vadd.f32 %v399, %v401
        %v404 = vmul.f32 %v402, %v253
        %v405 = vmul.f32 %v403, %v254
        %v406 = vsel %vm255, %v404, 0.0
        %407 = vadd.xlane.f32.xlu0 %v406
        %v408 = vpop.xlane.xlu0 %407
        %v409 = vsel %vm255, %v405, 0.0
        %410 = vadd.xlane.f32.xlu0 %v409
        %v411 = vpop.xlane.xlu0 %410
        %v412 = vsub.f32 0.0, %v408
        %v413 = vsub.f32 0.0, %v411
        %v414 = vadd.f32 %v332, %v396
        %v415 = vadd.f32 %v333, %v397
        %v416 = vsel %vm235, %v414, 0.0
        %v417 = vsel %vm236, %v415, 0.0
        %vm418 = vcmask 7168
        %v419 = vsel %vm418, %v416, 0.0
        %v420 = vsel %vm418, %v417, 0.0
        %v421 = vadd.f32 %v419, %v420
        %422 = vadd.xlane.f32.xlu0 %v421
        %v423 = vpop.xlane.xlu0 %422
        %v424 = vrot.slane %v423, 4
        %v425 = vadd.f32 %v423, %v424
        %v426 = vrot.slane %v425, 2
        %v427 = vadd.f32 %v425, %v426
        %v428 = vrot.slane %v427, 1
        %v429 = vadd.f32 %v427, %v428
        %s430 = vtos %v429
        %v431 = vsel %vm235, %v348, 0.0
        %v432 = vsel %vm236, %v349, 0.0
        %v433 = vsel %vm418, %v431, 0.0
        %v434 = vsel %vm418, %v432, 0.0
        %v435 = vadd.f32 %v433, %v434
        %436 = vadd.xlane.f32.xlu0 %v435
        %v437 = vpop.xlane.xlu0 %436
        %v438 = vrot.slane %v437, 4
        %v439 = vadd.f32 %v437, %v438
        %v440 = vrot.slane %v439, 2
        %v441 = vadd.f32 %v439, %v440
        %v442 = vrot.slane %v441, 1
        %v443 = vadd.f32 %v441, %v442
        %s444 = vtos %v443
        %v445 = vsel %vm235, %v412, 0.0
        %v446 = vsel %vm236, %v413, 0.0
        %v447 = vsel %vm418, %v445, 0.0
        %v448 = vsel %vm418, %v446, 0.0
        %v449 = vadd.f32 %v447, %v448
        %450 = vadd.xlane.f32.xlu0 %v449
        %v451 = vpop.xlane.xlu0 %450
        %v452 = vrot.slane %v451, 4
        %v453 = vadd.f32 %v451, %v452
        %v454 = vrot.slane %v453, 2
        %v455 = vadd.f32 %v453, %v454
        %v456 = vrot.slane %v455, 1
        %v457 = vadd.f32 %v455, %v456
        %s458 = vtos %v457
        %v459 = vrcp.pop %v264
        %v460 = vmul.f32 1.0, %v459
        %v461 = vrcp.pop %v265
        %v462 = vmul.f32 1.0, %v461
        %v463 = vsel %vm235, %v460, 0.0
        %v464 = vsel %vm236, %v462, 0.0
        %v465 = vsel %vm418, %v463, 0.0
        %v466 = vsel %vm418, %v464, 0.0
        %v467 = vadd.f32 %v465, %v466
        %468 = vadd.xlane.f32.xlu0 %v467
        %v469 = vpop.xlane.xlu0 %468
        %v470 = vrot.slane %v469, 4
        %v471 = vadd.f32 %v469, %v470
        %v472 = vrot.slane %v471, 2
        %v473 = vadd.f32 %v471, %v472
        %v474 = vrot.slane %v473, 1
        %v475 = vadd.f32 %v473, %v474
        %s476 = vtos %v475
        %v477 = vrcp.pop %v274
        %v478 = vmul.f32 1.0, %v477
        %v479 = vrcp.pop %v275
        %v480 = vmul.f32 1.0, %v479
        %v481 = vsel %vm235, %v478, 0.0
        %v482 = vsel %vm236, %v480, 0.0
        %v483 = vsel %vm418, %v481, 0.0
        %v484 = vsel %vm418, %v482, 0.0
        %v485 = vadd.f32 %v483, %v484
        %486 = vadd.xlane.f32.xlu0 %v485
        %v487 = vpop.xlane.xlu0 %486
        %v488 = vrot.slane %v487, 4
        %v489 = vadd.f32 %v487, %v488
        %v490 = vrot.slane %v489, 2
        %v491 = vadd.f32 %v489, %v490
        %v492 = vrot.slane %v491, 1
        %v493 = vadd.f32 %v491, %v492
        %s494 = vtos %v493
        %vm495 = vcmp.eq.s32.totalorder %v229, 0
        %vm496 = vmand %vm495, %vm247
        %v497 = vstv %s430
        %v498 = vsel %vm496, %v497, 0.0
        %vm499 = vcmp.eq.s32.totalorder %v229, 1
        %vm500 = vmand %vm499, %vm247
        %v501 = vstv %s444
        %v502 = vsel %vm500, %v501, 0.0
        %v503 = vadd.f32 %v498, %v502
        %vm504 = vcmp.eq.s32.totalorder %v229, 2
        %vm505 = vmand %vm504, %vm247
        %v506 = vstv %s476
        %v507 = vsel %vm505, %v506, 0.0
        %v508 = vadd.f32 %v503, %v507
        %vm509 = vcmp.eq.s32.totalorder %v229, 3
        %vm510 = vmand %vm509, %vm247
        %v511 = vstv %s458
        %v512 = vsel %vm510, %v511, 0.0
        %v513 = vadd.f32 %v508, %v512
        %vm514 = vcmp.eq.s32.totalorder %v229, 4
        %vm515 = vmand %vm514, %vm247
        %v516 = vstv %s494
        %v517 = vsel %vm515, %v516, 0.0
        %v518 = vadd.f32 %v513, %v517
        %519 = vst [vmem:[%s213] sm:$0xff] %v518
        %s520 = sand.u32 %s82, 1
        %s521 = scalar_lea.sflag [#allocation4], %s520
        %s522 = sand.u32 %s82, 1
        %s523 = smul.addr %s522, 8
        %s524 = scalar_lea.vmem [#allocation7], %s523
        // Predicated region
        $region37: #{tpu_custom_call.1} parent=27 // pred_check
          %p525 = pneg %p92
        $region38: #{tpu_custom_call.1} parent=27 // pred_check_branch
          %527 = sbr.rel (%p525) target = $region40
        $region39: #{tpu_custom_call.1} parent=27 // pred_region
          %s529 = ssub.s32 128, 128
          %530 = vsyncadd %s521, %s529
          %s531 = smul.addr %s22, 128
          %s532 = scalar_lea.hbm %s2, %s531
          %s534 = sshll.u32 %s524, 4
          %s535 = int_to_ptr.vmem [resolvable:$true] %s534
          %537 = dma.vmem_to_hbm [thread:$0]  %s535, 128, %s532, %s521
        $region40: #{tpu_custom_call.1} parent=27 // pred_fallthru
          _
      $region28: #{tpu_custom_call.1} parent=5 // pred_fallthru
        _
      %p538 = scmp.le.s32.totalorder 2, %s17
      // Predicated region
      $region41: #{tpu_custom_call.1} parent=5 // pred_check
        %p539 = pneg %p538
      $region42: #{tpu_custom_call.1} parent=5 // pred_check_branch
        %541 = sbr.rel (%p539) target = $region44
      $region43: #{tpu_custom_call.1} parent=5 // pred_region
        %s542 = ssub.s32 %s17, 2
        // Predicated region
        $region45: #{tpu_custom_call.1} parent=43 // pred_check
          %p543 = pneg %p98
        $region46: #{tpu_custom_call.1} parent=43 // pred_check_branch
          %545 = sbr.rel (%p543) target = $region48
        $region47: #{tpu_custom_call.1} parent=43 // pred_region
          %s546 = sand.u32 %s83, 1
          %s547 = scalar_lea.sflag [#allocation4], %s546
          %s548 = sand.u32 %s83, 1
          %s549 = smul.addr %s548, 8
          %s550 = scalar_lea.vmem [#allocation7], %s549
          %551 = dma.done %s547, 128
        $region48: #{tpu_custom_call.1} parent=43 // pred_fallthru
          _
      $region44: #{tpu_custom_call.1} parent=5 // pred_fallthru
        _
    $region6: #{tpu_custom_call.1} parent=1 // loop_footer
      %s21 = sadd.s32 1, %s17
    $region7: #{tpu_custom_call.1} parent=1 // loop_footer_branch
      %16 = sbr.rel target = $region3
    $region8: #{tpu_custom_call.1} parent=1 // loop_exit
      _
    %552 = vsyncpa [#allocation3], 1
    %s553 = scalar_lea.sflag [#allocation3], 1
    %554 = vsyncpa %s553, 1
    %555 = vsyncpa [#allocation6], 1
    %s556 = scalar_lea.sflag [#allocation6], 1
    %557 = vsyncpa %s556, 1
    %558 = vsyncpa [#allocation4], 1
    %s559 = scalar_lea.sflag [#allocation4], 1
    %560 = vsyncpa %s559, 1

</llo_original>
